<compile_context>
chip_gen: v6e
topology: v6e:2x2x1
jax: 0.10.0
libtpu: 0.0.40
codegen_flags: <defaults>
</compile_context>

<pallas_src>
import jax
import jax.numpy as jnp
from jax.experimental import pallas as pl
from jax.experimental.pallas import tpu as pltpu


# ----------------------------- Pallas kernel --------------------------------

def _make_root_kernel(n_children: int, n_w: int, residual: bool, fuse_k: bool):
    """concat -> 1x1 conv -> BN(eval) -> (+children[0]) -> ReLU on one tile."""

    def kernel(*refs):
        x_refs = refs[:n_children]                    # each (C_i, TP), f32
        w_refs = refs[n_children:n_children + n_w]    # bf16, BN scale folded in
        b_ref = refs[n_children + n_w]                # (planes, 1) f32 folded BN bias
        o_ref = refs[n_children + n_w + 1]            # (planes, TP)

        if fuse_k:
            # Small per-child C_i: fuse into one big-K dot.
            if n_children > 1:
                x_cat = jnp.concatenate([x[...] for x in x_refs], axis=0)
            else:
                x_cat = x_refs[0][...]
            acc = jnp.dot(w_refs[0][...], x_cat.astype(jnp.bfloat16),
                          preferred_element_type=jnp.float32)
        else:
            acc = jnp.dot(w_refs[0][...], x_refs[0][...].astype(jnp.bfloat16),
                          preferred_element_type=jnp.float32)
            for i in range(1, n_children):
                acc = acc + jnp.dot(w_refs[i][...],
                                    x_refs[i][...].astype(jnp.bfloat16),
                                    preferred_element_type=jnp.float32)

        acc = acc + b_ref[...]                        # folded eval-mode BatchNorm
        if residual:
            acc = acc + x_refs[0][...]                # exact f32 residual add
        o_ref[...] = jnp.maximum(acc, 0.0).astype(o_ref.dtype)   # ReLU

    return kernel


# --------------------------------- wrapper -----------------------------------

def _pick_tp(p_pad: int, tp_req: int, min_tiles: int) -> int:
    """Largest lane tile (multiple of 128) dividing p_pad, <= tp_req, giving at
    least `min_tiles` spatial grid steps when possible."""
    tp = max(128, min(tp_req, p_pad) // 128 * 128)
    while p_pad % tp:
        tp -= 128
    while p_pad // tp < min_tiles and tp > 128:
        tp -= 128
        while p_pad % tp:
            tp -= 128
    return tp


def root_forward(children, w_conv, bn_gamma, bn_beta, bn_mean, bn_var, *,
                 residual, eps=1e-5, tp=1024, out_dtype=jnp.float32):
    """Forward of Root: ReLU(BN(Conv1x1(cat(children, dim=1))) [+ children[0]]).

    children : list of (N, C_i, H, W) float32 (kept f32 in HBM; cast to bf16 on
               the VPU inside the kernel for the MXU dot, f32 accumulation)
    w_conv   : (planes, sum_i C_i, 1, 1) float32   (Conv2d, bias=False, k=1)
    bn_*     : eval-mode BatchNorm2d parameters, shape (planes,)
    """
    n_children = len(children)
    N, _, H, W = children[0].shape
    P = H * W
    planes = int(w_conv.shape[0])
    c_sizes = [int(c.shape[1]) for c in children]
    cin = sum(c_sizes)
    assert w_conv.shape[1] == cin and w_conv.shape[2:] == (1, 1)
    if residual:
        assert c_sizes[0] == planes, "residual add needs children[0] channels == planes"

    # lane-dense spatial axis: pad P to a multiple of 128 and pick the tile.
    p_pad = -(-P // 128) * 128
    min_tiles = 2 if N == 1 else 1        # keep both v7x TensorCores busy
    tp = _pick_tp(p_pad, tp, min_tiles)
    n_ptiles = p_pad // tp

    # fold eval-mode BatchNorm into the (bias-free) 1x1 conv
    scale = bn_gamma / jnp.sqrt(bn_var + eps)                      # (planes,)
    bias = (bn_beta - bn_mean * scale).reshape(planes, 1).astype(jnp.float32)
    w2d = (w_conv[:, :, 0, 0] * scale[:, None]).astype(jnp.float32)  # (planes, Cin)

    # children stream f32 straight from HBM (no extra bf16 conversion pass).
    # TODO(synk): if the producer can emit bf16 activations, accept them here and
    # skip the in-kernel cast to halve the input HBM traffic.
    x_list = []
    for c, ci in zip(children, c_sizes):
        x3 = c.reshape(N, ci, P).astype(jnp.float32)
        if p_pad != P:
            x3 = jnp.pad(x3, ((0, 0), (0, 0), (0, p_pad - P)))
        x_list.append(x3)

    fuse_k = max(c_sizes) < 128           # small-K children -> one fused big-K dot
    if fuse_k:
        w_list = [w2d.astype(jnp.bfloat16)]
    else:
        w_list, off = [], 0
        for ci in c_sizes:
            w_list.append(w2d[:, off:off + ci].astype(jnp.bfloat16))
            off += ci
    n_w = len(w_list)

    out_shape = jax.ShapeDtypeStruct((N, planes, p_pad), out_dtype)
    out_spec = pl.BlockSpec((None, planes, tp), lambda n, p: (n, 0, p))
    x_specs = [pl.BlockSpec((None, ci, tp), lambda n, p: (n, 0, p)) for ci in c_sizes]

    # right-size the scoped-VMEM budget from the actual tile footprint
    out_itemsize = jnp.dtype(out_dtype).itemsize
    footprint = (2 * sum(ci * tp * 4 for ci in c_sizes)          # dbl-buffered child tiles (f32)
                 + 2 * (planes * cin * 2 + planes * 4)           # weights (bf16) + bias
                 + 2 * planes * tp * out_itemsize                # dbl-buffered output tile
                 + cin * tp * 2 + planes * tp * 4)               # in-kernel concat + f32 acc
    vmem_limit = min(max(int(1.5 * footprint) + (2 << 20), 16 << 20), 64 << 20)

    kernel = _make_root_kernel(n_children, n_w, residual, fuse_k)
    operands = (*x_list, *w_list, bias)

    def call(single_buffer_consts):
        wkw = dict(pipeline_mode=pl.Buffered(1)) if single_buffer_consts else {}
        if fuse_k:
            w_specs = [pl.BlockSpec((planes, cin), lambda n, p: (0, 0), **wkw)]
        else:
            w_specs = [pl.BlockSpec((planes, ci), lambda n, p: (0, 0), **wkw)
                       for ci in c_sizes]
        b_spec = pl.BlockSpec((planes, 1), lambda n, p: (0, 0), **wkw)
        return pl.pallas_call(
            kernel,
            out_shape=out_shape,
            grid=(N, n_ptiles),
            in_specs=x_specs + w_specs + [b_spec],
            out_specs=out_spec,
            compiler_params=pltpu.CompilerParams(
                dimension_semantics=("parallel", "parallel"),
                vmem_limit_bytes=vmem_limit,
            ),
        )(*operands)

    try:
        out = call(True)       # constant weight/bias blocks single-buffered
    except Exception:
        out = call(False)      # fallback if BlockSpec(pipeline_mode=...) unsupported

    if p_pad != P:
        out = out[:, :, :P]
    return out.reshape(N, planes, H, W)    # (N, planes, P) is already NCHW order


# ----------------------------------- main ------------------------------------

if __name__ == "__main__":
    key = jax.random.PRNGKey(0)
    HIGH = jax.lax.Precision.HIGHEST
    eps = 1e-5

    # -------- config 1: residual Root, f32 output, spatial tiling (grid (2,2)) --
    N, H, W = 2, 16, 16
    c1, c2, planes = 8, 8, 8
    k = jax.random.split(key, 8)
    x1 = jax.random.normal(k[0], (N, c1, H, W), jnp.float32)
    x2 = jax.random.normal(k[1], (N, c2, H, W), jnp.float32)
    w_conv = jax.random.normal(k[2], (planes, c1 + c2, 1, 1), jnp.float32) / jnp.sqrt(c1 + c2)
    gamma = 1.0 + 0.1 * jax.random.normal(k[3], (planes,), jnp.float32)
    beta = 0.1 * jax.random.normal(k[4], (planes,), jnp.float32)
    mean = 0.1 * jax.random.normal(k[5], (planes,), jnp.float32)
    var = jnp.abs(jax.random.normal(k[6], (planes,), jnp.float32)) + 0.5

    y = root_forward([x1, x2], w_conv, gamma, beta, mean, var,
                     residual=True, eps=eps, tp=128)   # tp=128 -> grid (2, 2)
    y = jax.block_until_ready(y)

    x_cat = jnp.concatenate([x1, x2], axis=1)
    scale = gamma / jnp.sqrt(var + eps)
    bias = beta - mean * scale
    w2d = w_conv[:, :, 0, 0] * scale[:, None]

    # exact f32 reference
    ref = jnp.einsum('oc,nchw->nohw', w2d, x_cat, precision=HIGH)
    ref = jnp.maximum(ref + bias[None, :, None, None] + x1, 0.0)
    # mixed-precision reference matching the kernel numerics (bf16 dot operands,
    # f32 accumulation, exact f32 residual)
    w_bf = w2d.astype(jnp.bfloat16).astype(jnp.float32)
    x_bf = x_cat.astype(jnp.bfloat16).astype(jnp.float32)
    ref_mp = jnp.einsum('oc,nchw->nohw', w_bf, x_bf, precision=HIGH)
    ref_mp = jnp.maximum(ref_mp + bias[None, :, None, None] + x1, 0.0)

    assert y.shape == (N, planes, H, W), y.shape
    assert y.dtype == jnp.float32
    assert bool(jnp.all(jnp.isfinite(y))) and bool(jnp.all(y >= 0.0))
    err_mp = float(jnp.max(jnp.abs(y - ref_mp)))
    err_f32 = float(jnp.max(jnp.abs(y - ref)))
    assert err_mp < 1e-4, err_mp
    assert err_f32 < 5e-2, err_f32

    # -------- config 2: no residual, bf16 output, P=196 (padded to 256), N=1 ----
    N2, H2, W2 = 1, 14, 14
    c3, c4, planes2 = 16, 16, 16
    k2 = jax.random.split(k[7], 7)
    x3 = jax.random.normal(k2[0], (N2, c3, H2, W2), jnp.float32)
    x4 = jax.random.normal(k2[1], (N2, c4, H2, W2), jnp.float32)
    w_conv2 = jax.random.normal(k2[2], (planes2, c3 + c4, 1, 1), jnp.float32) / jnp.sqrt(c3 + c4)
    gamma2 = 1.0 + 0.1 * jax.random.normal(k2[3], (planes2,), jnp.float32)
    beta2 = 0.1 * jax.random.normal(k2[4], (planes2,), jnp.float32)
    mean2 = 0.1 * jax.random.normal(k2[5], (planes2,), jnp.float32)
    var2 = jnp.abs(jax.random.normal(k2[6], (planes2,), jnp.float32)) + 0.5

    y2 = root_forward([x3, x4], w_conv2, gamma2, beta2, mean2, var2,
                      residual=False, eps=eps, out_dtype=jnp.bfloat16)
    y2 = jax.block_until_ready(y2)

    x_cat2 = jnp.concatenate([x3, x4], axis=1)
    scale2 = gamma2 / jnp.sqrt(var2 + eps)
    bias2 = beta2 - mean2 * scale2
    w2d2 = w_conv2[:, :, 0, 0] * scale2[:, None]
    ref2 = jnp.einsum('oc,nchw->nohw', w2d2, x_cat2, precision=HIGH)
    ref2 = jnp.maximum(ref2 + bias2[None, :, None, None], 0.0)
    w_bf2 = w2d2.astype(jnp.bfloat16).astype(jnp.float32)
    x_bf2 = x_cat2.astype(jnp.bfloat16).astype(jnp.float32)
    ref2_mp = jnp.einsum('oc,nchw->nohw', w_bf2, x_bf2, precision=HIGH)
    ref2_mp = jnp.maximum(ref2_mp + bias2[None, :, None, None], 0.0)

    assert y2.shape == (N2, planes2, H2, W2), y2.shape
    assert y2.dtype == jnp.bfloat16
    y2f = y2.astype(jnp.float32)
    assert bool(jnp.all(jnp.isfinite(y2f))) and bool(jnp.all(y2f >= 0.0))
    err2_mp = float(jnp.max(jnp.abs(y2f - ref2_mp)))
    err2_f32 = float(jnp.max(jnp.abs(y2f - ref2)))
    assert err2_mp < 3e-2, err2_mp     # only bf16 output rounding on top of mp ref
    assert err2_f32 < 1.5e-1, err2_f32

    print("KERNEL_OK")
</pallas_src>

<mosaic_0001>
module attributes {stable_mosaic.version = 11 : i64} {
  func.func @kernel(%arg0: i32, %arg1: i32, %arg2: memref<1x8x128xf32, #tpu.memory_space<vmem>>, %arg3: memref<1x8x128xf32, #tpu.memory_space<vmem>>, %arg4: memref<8x16xbf16, #tpu.memory_space<vmem>>, %arg5: memref<8x1xf32, #tpu.memory_space<vmem>>, %arg6: memref<1x8x128xf32, #tpu.memory_space<vmem>>) attributes {dimension_semantics = [#tpu.dimension_semantics<parallel>, #tpu.dimension_semantics<parallel>], iteration_bounds = array<i64: 2, 2>, scalar_prefetch = 0 : i64, scratch_operands = 0 : i64, tpu.core_type = #tpu.core_type<tc>, window_params = [{transform_indices = @transform_0, window_bounds = array<i64: 1, 8, 128>}, {transform_indices = @transform_1, window_bounds = array<i64: 1, 8, 128>}, {pipeline_mode = #tpu.pipeline_mode<synchronous>, transform_indices = @transform_2, window_bounds = array<i64: 8, 16>}, {pipeline_mode = #tpu.pipeline_mode<synchronous>, transform_indices = @transform_3, window_bounds = array<i64: 8, 1>}, {transform_indices = @transform_4, window_bounds = array<i64: 1, 8, 128>}]} {
    %c0 = arith.constant 0 : index
    %c0_0 = arith.constant 0 : index
    %c0_1 = arith.constant 0 : index
    %0 = vector.load %arg2[%c0, %c0_0, %c0_1] : memref<1x8x128xf32, #tpu.memory_space<vmem>>, vector<1x8x128xf32>
    %1 = vector.shape_cast %0 : vector<1x8x128xf32> to vector<8x128xf32>
    %c0_2 = arith.constant 0 : index
    %c0_3 = arith.constant 0 : index
    %c0_4 = arith.constant 0 : index
    %2 = vector.load %arg3[%c0_2, %c0_3, %c0_4] : memref<1x8x128xf32, #tpu.memory_space<vmem>>, vector<1x8x128xf32>
    %3 = vector.shape_cast %2 : vector<1x8x128xf32> to vector<8x128xf32>
    %4 = tpu.concatenate %1, %3 in 0 : vector<8x128xf32>, vector<8x128xf32> -> vector<16x128xf32>
    %c0_5 = arith.constant 0 : index
    %c0_6 = arith.constant 0 : index
    %5 = vector.load %arg4[%c0_5, %c0_6] : memref<8x16xbf16, #tpu.memory_space<vmem>>, vector<8x16xbf16>
    %6 = arith.truncf %4 : vector<16x128xf32> to vector<16x128xbf16>
    %cst = arith.constant dense<0.000000e+00> : vector<8x128xf32>
    %7 = tpu.matmul %5, %6, %cst {dimension_numbers = #tpu.dot_dimension_numbers<[1], [0], [0], [1], [0, 0, 1, 1], [], []>} : vector<8x16xbf16>, vector<16x128xbf16>, vector<8x128xf32> -> vector<8x128xf32>
    %c0_7 = arith.constant 0 : index
    %c0_8 = arith.constant 0 : index
    %8 = vector.load %arg5[%c0_7, %c0_8] : memref<8x1xf32, #tpu.memory_space<vmem>>, vector<8x1xf32>
    %9 = vector.broadcast %8 : vector<8x1xf32> to vector<8x128xf32>
    %10 = arith.addf %7, %9 : vector<8x128xf32>
    %c0_9 = arith.constant 0 : index
    %c0_10 = arith.constant 0 : index
    %c0_11 = arith.constant 0 : index
    %11 = vector.load %arg2[%c0_9, %c0_10, %c0_11] : memref<1x8x128xf32, #tpu.memory_space<vmem>>, vector<1x8x128xf32>
    %12 = vector.shape_cast %11 : vector<1x8x128xf32> to vector<8x128xf32>
    %13 = arith.addf %10, %12 : vector<8x128xf32>
    %cst_12 = arith.constant 0.000000e+00 : f32
    %14 = vector.broadcast %cst_12 : f32 to vector<8x128xf32>
    %15 = arith.maximumf %13, %14 : vector<8x128xf32>
    %c0_13 = arith.constant 0 : index
    %c0_14 = arith.constant 0 : index
    %c0_15 = arith.constant 0 : index
    %16 = vector.load %arg6[%c0_13, %c0_14, %c0_15] : memref<1x8x128xf32, #tpu.memory_space<vmem>>, vector<1x8x128xf32>
    %17 = vector.shape_cast %16 : vector<1x8x128xf32> to vector<8x128xf32>
    %18 = vector.shape_cast %15 : vector<8x128xf32> to vector<1x8x128xf32>
    tpu.vector_store %arg6[%c0_13, %c0_14, %c0_15], %18 {strides = array<i32>} : memref<1x8x128xf32, #tpu.memory_space<vmem>>, vector<1x8x128xf32>,
    return
  }
  func.func @transform_0(%arg0: i32, %arg1: i32) -> (i32, i32, i32) {
    %c0_i32 = arith.constant 0 : i32
    %c0_i32_0 = arith.constant 0 : i32
    return %arg0, %c0_i32, %arg1 : i32, i32, i32
  }
  func.func @transform_1(%arg0: i32, %arg1: i32) -> (i32, i32, i32) {
    %c0_i32 = arith.constant 0 : i32
    %c0_i32_0 = arith.constant 0 : i32
    return %arg0, %c0_i32, %arg1 : i32, i32, i32
  }
  func.func @transform_2(%arg0: i32, %arg1: i32) -> (i32, i32) {
    %c0_i32 = arith.constant 0 : i32
    %c0_i32_0 = arith.constant 0 : i32
    %c0_i32_1 = arith.constant 0 : i32
    return %c0_i32, %c0_i32_0 : i32, i32
  }
  func.func @transform_3(%arg0: i32, %arg1: i32) -> (i32, i32) {
    %c0_i32 = arith.constant 0 : i32
    %c0_i32_0 = arith.constant 0 : i32
    %c0_i32_1 = arith.constant 0 : i32
    return %c0_i32, %c0_i32_0 : i32, i32
  }
  func.func @transform_4(%arg0: i32, %arg1: i32) -> (i32, i32, i32) {
    %c0_i32 = arith.constant 0 : i32
    %c0_i32_0 = arith.constant 0 : i32
    return %arg0, %c0_i32, %arg1 : i32, i32, i32
  }
}

module attributes {stable_mosaic.version = 11 : i64} {
  func.func @kernel(%arg0: i32, %arg1: i32, %arg2: memref<1x8x128xf32, #tpu.memory_space<vmem>>, %arg3: memref<1x8x128xf32, #tpu.memory_space<vmem>>, %arg4: memref<8x16xbf16, #tpu.memory_space<vmem>>, %arg5: memref<8x1xf32, #tpu.memory_space<vmem>>, %arg6: memref<1x8x128xf32, #tpu.memory_space<vmem>>) attributes {dimension_semantics = [#tpu.dimension_semantics<parallel>, #tpu.dimension_semantics<parallel>], iteration_bounds = array<i64: 2, 2>, scalar_prefetch = 0 : i64, scratch_operands = 0 : i64, tpu.core_type = #tpu.core_type<tc>, window_params = [{transform_indices = @transform_0, window_bounds = array<i64: 1, 8, 128>}, {transform_indices = @transform_1, window_bounds = array<i64: 1, 8, 128>}, {pipeline_mode = #tpu.pipeline_mode<synchronous>, transform_indices = @transform_2, window_bounds = array<i64: 8, 16>}, {pipeline_mode = #tpu.pipeline_mode<synchronous>, transform_indices = @transform_3, window_bounds = array<i64: 8, 1>}, {transform_indices = @transform_4, window_bounds = array<i64: 1, 8, 128>}]} {
    %c0 = arith.constant 0 : index
    %c0_0 = arith.constant 0 : index
    %c0_1 = arith.constant 0 : index
    %0 = vector.load %arg2[%c0, %c0_0, %c0_1] : memref<1x8x128xf32, #tpu.memory_space<vmem>>, vector<1x8x128xf32>
    %1 = vector.shape_cast %0 : vector<1x8x128xf32> to vector<8x128xf32>
    %c0_2 = arith.constant 0 : index
    %c0_3 = arith.constant 0 : index
    %c0_4 = arith.constant 0 : index
    %2 = vector.load %arg3[%c0_2, %c0_3, %c0_4] : memref<1x8x128xf32, #tpu.memory_space<vmem>>, vector<1x8x128xf32>
    %3 = vector.shape_cast %2 : vector<1x8x128xf32> to vector<8x128xf32>
    %4 = tpu.concatenate %1, %3 in 0 : vector<8x128xf32>, vector<8x128xf32> -> vector<16x128xf32>
    %c0_5 = arith.constant 0 : index
    %c0_6 = arith.constant 0 : index
    %5 = vector.load %arg4[%c0_5, %c0_6] : memref<8x16xbf16, #tpu.memory_space<vmem>>, vector<8x16xbf16>
    %6 = arith.truncf %4 : vector<16x128xf32> to vector<16x128xbf16>
    %cst = arith.constant dense<0.000000e+00> : vector<8x128xf32>
    %7 = tpu.matmul %5, %6, %cst {dimension_numbers = #tpu.dot_dimension_numbers<[1], [0], [0], [1], [0, 0, 1, 1], [], []>} : vector<8x16xbf16>, vector<16x128xbf16>, vector<8x128xf32> -> vector<8x128xf32>
    %c0_7 = arith.constant 0 : index
    %c0_8 = arith.constant 0 : index
    %8 = vector.load %arg5[%c0_7, %c0_8] : memref<8x1xf32, #tpu.memory_space<vmem>>, vector<8x1xf32>
    %9 = vector.broadcast %8 : vector<8x1xf32> to vector<8x128xf32>
    %10 = arith.addf %7, %9 : vector<8x128xf32>
    %c0_9 = arith.constant 0 : index
    %c0_10 = arith.constant 0 : index
    %c0_11 = arith.constant 0 : index
    %11 = vector.load %arg2[%c0_9, %c0_10, %c0_11] : memref<1x8x128xf32, #tpu.memory_space<vmem>>, vector<1x8x128xf32>
    %12 = vector.shape_cast %11 : vector<1x8x128xf32> to vector<8x128xf32>
    %13 = arith.addf %10, %12 : vector<8x128xf32>
    %cst_12 = arith.constant 0.000000e+00 : f32
    %14 = vector.broadcast %cst_12 : f32 to vector<8x128xf32>
    %15 = arith.maximumf %13, %14 : vector<8x128xf32>
    %c0_13 = arith.constant 0 : index
    %c0_14 = arith.constant 0 : index
    %c0_15 = arith.constant 0 : index
    %16 = vector.load %arg6[%c0_13, %c0_14, %c0_15] : memref<1x8x128xf32, #tpu.memory_space<vmem>>, vector<1x8x128xf32>
    %17 = vector.shape_cast %16 : vector<1x8x128xf32> to vector<8x128xf32>
    %18 = vector.shape_cast %15 : vector<8x128xf32> to vector<1x8x128xf32>
    tpu.vector_store %arg6[%c0_13, %c0_14, %c0_15], %18 {strides = array<i32>} : memref<1x8x128xf32, #tpu.memory_space<vmem>>, vector<1x8x128xf32>,
    return
  }
  func.func @transform_0(%arg0: i32, %arg1: i32) -> (i32, i32, i32) {
    %c0_i32 = arith.constant 0 : i32
    %c0_i32_0 = arith.constant 0 : i32
    return %arg0, %c0_i32, %arg1 : i32, i32, i32
  }
  func.func @transform_1(%arg0: i32, %arg1: i32) -> (i32, i32, i32) {
    %c0_i32 = arith.constant 0 : i32
    %c0_i32_0 = arith.constant 0 : i32
    return %arg0, %c0_i32, %arg1 : i32, i32, i32
  }
  func.func @transform_2(%arg0: i32, %arg1: i32) -> (i32, i32) {
    %c0_i32 = arith.constant 0 : i32
    %c0_i32_0 = arith.constant 0 : i32
    %c0_i32_1 = arith.constant 0 : i32
    return %c0_i32, %c0_i32_0 : i32, i32
  }
  func.func @transform_3(%arg0: i32, %arg1: i32) -> (i32, i32) {
    %c0_i32 = arith.constant 0 : i32
    %c0_i32_0 = arith.constant 0 : i32
    %c0_i32_1 = arith.constant 0 : i32
    return %c0_i32, %c0_i32_0 : i32, i32
  }
  func.func @transform_4(%arg0: i32, %arg1: i32) -> (i32, i32, i32) {
    %c0_i32 = arith.constant 0 : i32
    %c0_i32_0 = arith.constant 0 : i32
    return %arg0, %c0_i32, %arg1 : i32, i32, i32
  }
}

</mosaic_0001>

<llo_original>
// kernel: tpu_custom_call.1
$region0: #{tpu_custom_call.1}
  #allocation0 [shape = 'u32[]', space=smem, size = 0x4, offset = 0x4, fixed_abs, tag = 'smem constant byte address 0x4 - core index']
  #allocation1 [shape = 'u32[144,128]{1,0:T(1,128)}', space=vmem, size = 0x12000, scoped, tag = 'internal scratch']
  %s0 = inlined_call_operand.hbm [shape: f32[2,8,256], index: 0, kind: input, shape index: {}]
  %s1 = inlined_call_operand.hbm [shape: f32[2,8,256], index: 1, kind: input, shape index: {}]
  %s2 = inlined_call_operand.vmem [shape: bf16[8,16], index: 2, kind: input, shape index: {}]
  %s3 = inlined_call_operand.vmem [shape: f32[8,1], index: 3, kind: input, shape index: {}]
  %s4 = inlined_call_operand.hbm [shape: f32[2,8,256], index: 4, kind: output, shape index: {}]
  %s5 = sld [smem:[#allocation0]]
  $region57: #{tpu_custom_call.1} parent=0
    _
  %s7 = ssub.s32 1, %s5
  %s8 = scalar_select 0, %s7, %s5
  $region1: #{tpu_custom_call.1} parent=0
    #allocation2 [shape = 'u8[8192]{0}', space=vmem, size = 0x2000, scoped, tag = 'input window, operand 0']
    #allocation3 [shape = 's32[2]{0}', space=sflag, size = 0x8, scoped, tag = 'scoped memory for tpu_custom_call.1']
    #allocation4 [shape = 's32[2]{0}', space=sflag, size = 0x8, scoped, tag = 'scoped memory for tpu_custom_call.1']
    #allocation5 [shape = 'u8[8192]{0}', space=vmem, size = 0x2000, scoped, tag = 'input window, operand 1']
    #allocation6 [shape = 's32[2]{0}', space=sflag, size = 0x8, scoped, tag = 'scoped memory for tpu_custom_call.1']
    #allocation7 [shape = 'u8[8192]{0}', space=vmem, size = 0x2000, scoped, tag = 'output window, operand 0']
    %9 = vsyncpa [#allocation3], 0
    %s10 = scalar_lea.sflag [#allocation3], 1
    %11 = vsyncpa %s10, 0
    %12 = vsyncpa [#allocation6], 0
    %s13 = scalar_lea.sflag [#allocation6], 1
    %14 = vsyncpa %s13, 0
    %15 = vsyncpa [#allocation4], 0
    %s16 = scalar_lea.sflag [#allocation4], 1
    %17 = vsyncpa %s16, 0
    loop: start=0, step=1, limit=6
    $region2: #{tpu_custom_call.1} parent=1 // loop_pre_header
      _
    $region3: #{tpu_custom_call.1} parent=1 // loop_header
      %s19 = sphi 0, %s23
      %p20 = scmp.ge.s32.totalorder %s19, 6
      %s26 = sphi 0, %s38
      %s27 = sphi 0, %s34
      %s28 = sphi 0, %s26
      %s29 = sphi 0, %s27
      %s30 = sphi 0, %s28
      %s31 = sphi 0, %s29
      %s43 = sphi 0, %s45
      %s46 = sphi 0, %s43
      %s47 = sphi 0, %s46
      %s63 = sphi 0, %s47
      %s71 = sphi 0, %s73
      %s74 = sphi 0, %s71
      %s75 = sphi 0, %s74
      %s91 = sphi 0, %s75
      %s95 = sphi 0, %s95
      %s97 = sphi 0, %s95
      %s98 = sphi 0, %s97
      %s112 = sphi 0, %s98
      %s116 = sphi 0, %s116
      %s118 = sphi 0, %s116
      %s119 = sphi 0, %s118
      %s133 = sphi 0, %s119
      %s141 = sphi 0, %s143
      %s144 = sphi 0, %s141
      %s145 = sphi 0, %s144
      %s161 = sphi 0, %s145
    $region4: #{tpu_custom_call.1} parent=1 // loop_header_branch
      %22 = sbr.rel (%p20) target = $region8
    $region5: #{tpu_custom_call.1} parent=1 // loop_body
      %s24 = ssub.s32 %s19, 1
      %s25 = ssub.s32 %s19, 2
      %s32 = sadd.s32 1, %s27
      %p33 = scmp.ge.s32.totalorder %s32, 2
      %s34 = scalar_select %p33, 0, %s32
      %s35 = sadd.s32 1, %s26
      %s36 = scalar_select %p33, %s35, %s26
      %p37 = scmp.ge.s32.totalorder %s36, 2
      %s38 = scalar_select %p37, 0, %s36
      %s39 = ssub.s32 %s26, %s38
      %s40 = ssub.s32 %s27, %s34
      %s41 = sor.u32 %s39, %s40
      %p42 = scmp.eq.s32.totalorder %s41, 0
      %s44 = sadd.s32 %s43, 1
      %s45 = scalar_select %p42, %s43, %s44
      %p48 = pneg %p42
      %p49 = scmp.eq.s32.totalorder %s19, 3
      %p50 = por %p48, %p49
      %p51 = scmp.ne.s32.totalorder %s43, %s46
      %p52 = scmp.eq.s32.totalorder %s19, 0
      %p53 = por %p51, %p52
      %p54 = scmp.ne.s32.totalorder %s43, %s46
      %p55 = scmp.eq.s32.totalorder %s24, 3
      %p56 = por %p54, %p55
      %p57 = scmp.ne.s32.totalorder %s46, %s47
      %p58 = scmp.eq.s32.totalorder %s24, 0
      %p59 = por %p57, %p58
      %p60 = scmp.ne.s32.totalorder %s46, %s47
      %p61 = scmp.eq.s32.totalorder %s25, 3
      %p62 = por %p60, %p61
      %p64 = scmp.ne.s32.totalorder %s47, %s63
      %p65 = scmp.eq.s32.totalorder %s25, 0
      %p66 = por %p64, %p65
      %s67 = ssub.s32 %s26, %s38
      %s68 = ssub.s32 %s27, %s34
      %s69 = sor.u32 %s67, %s68
      %p70 = scmp.eq.s32.totalorder %s69, 0
      %s72 = sadd.s32 %s71, 1
      %s73 = scalar_select %p70, %s71, %s72
      %p76 = pneg %p70
      %p77 = scmp.eq.s32.totalorder %s19, 3
      %p78 = por %p76, %p77
      %p79 = scmp.ne.s32.totalorder %s71, %s74
      %p80 = scmp.eq.s32.totalorder %s19, 0
      %p81 = por %p79, %p80
      %p82 = scmp.ne.s32.totalorder %s71, %s74
      %p83 = scmp.eq.s32.totalorder %s24, 3
      %p84 = por %p82, %p83
      %p85 = scmp.ne.s32.totalorder %s74, %s75
      %p86 = scmp.eq.s32.totalorder %s24, 0
      %p87 = por %p85, %p86
      %p88 = scmp.ne.s32.totalorder %s74, %s75
      %p89 = scmp.eq.s32.totalorder %s25, 3
      %p90 = por %p88, %p89
      %p92 = scmp.ne.s32.totalorder %s75, %s91
      %p93 = scmp.eq.s32.totalorder %s25, 0
      %p94 = por %p92, %p93
      %s96 = sadd.s32 %s95, 1
      %p99 = scmp.eq.s32.totalorder %s19, 3
      %p100 = scmp.ne.s32.totalorder %s95, %s97
      %p101 = scmp.eq.s32.totalorder %s19, 0
      %p102 = por %p100, %p101
      %p103 = scmp.ne.s32.totalorder %s95, %s97
      %p104 = scmp.eq.s32.totalorder %s24, 3
      %p105 = por %p103, %p104
      %p106 = scmp.ne.s32.totalorder %s97, %s98
      %p107 = scmp.eq.s32.totalorder %s24, 0
      %p108 = por %p106, %p107
      %p109 = scmp.ne.s32.totalorder %s97, %s98
      %p110 = scmp.eq.s32.totalorder %s25, 3
      %p111 = por %p109, %p110
      %p113 = scmp.ne.s32.totalorder %s98, %s112
      %p114 = scmp.eq.s32.totalorder %s25, 0
      %p115 = por %p113, %p114
      %s117 = sadd.s32 %s116, 1
      %p120 = scmp.eq.s32.totalorder %s19, 3
      %p121 = scmp.ne.s32.totalorder %s116, %s118
      %p122 = scmp.eq.s32.totalorder %s19, 0
      %p123 = por %p121, %p122
      %p124 = scmp.ne.s32.totalorder %s116, %s118
      %p125 = scmp.eq.s32.totalorder %s24, 3
      %p126 = por %p124, %p125
      %p127 = scmp.ne.s32.totalorder %s118, %s119
      %p128 = scmp.eq.s32.totalorder %s24, 0
      %p129 = por %p127, %p128
      %p130 = scmp.ne.s32.totalorder %s118, %s119
      %p131 = scmp.eq.s32.totalorder %s25, 3
      %p132 = por %p130, %p131
      %p134 = scmp.ne.s32.totalorder %s119, %s133
      %p135 = scmp.eq.s32.totalorder %s25, 0
      %p136 = por %p134, %p135
      %s137 = ssub.s32 %s26, %s38
      %s138 = ssub.s32 %s27, %s34
      %s139 = sor.u32 %s137, %s138
      %p140 = scmp.eq.s32.totalorder %s139, 0
      %s142 = sadd.s32 %s141, 1
      %s143 = scalar_select %p140, %s141, %s142
      %p146 = pneg %p140
      %p147 = scmp.eq.s32.totalorder %s19, 3
      %p148 = por %p146, %p147
      %p149 = scmp.ne.s32.totalorder %s141, %s144
      %p150 = scmp.eq.s32.totalorder %s19, 0
      %p151 = por %p149, %p150
      %p152 = scmp.ne.s32.totalorder %s141, %s144
      %p153 = scmp.eq.s32.totalorder %s24, 3
      %p154 = por %p152, %p153
      %p155 = scmp.ne.s32.totalorder %s144, %s145
      %p156 = scmp.eq.s32.totalorder %s24, 0
      %p157 = por %p155, %p156
      %p158 = scmp.ne.s32.totalorder %s144, %s145
      %p159 = scmp.eq.s32.totalorder %s25, 3
      %p160 = por %p158, %p159
      %p162 = scmp.ne.s32.totalorder %s145, %s161
      %p163 = scmp.eq.s32.totalorder %s25, 0
      %p164 = por %p162, %p163
      %p165 = scmp.le.s32.totalorder 1, %s19
      %p166 = scmp.lt.s32.totalorder %s19, 5
      %p167 = pnand %p165, %p166
      %p168 = pneg %p167
      // Predicated region
      $region9: #{tpu_custom_call.1} parent=5 // pred_check
        _
      $region10: #{tpu_custom_call.1} parent=5 // pred_check_branch
        %170 = sbr.rel (%p167) target = $region12
      $region11: #{tpu_custom_call.1} parent=5 // pred_region
        %s171 = ssub.s32 %s19, 1
        // Predicated region
        $region13: #{tpu_custom_call.1} parent=11 // pred_check
          %p172 = pneg %p108
        $region14: #{tpu_custom_call.1} parent=11 // pred_check_branch
          %174 = sbr.rel (%p172) target = $region16
        $region15: #{tpu_custom_call.1} parent=11 // pred_region
          _
        $region16: #{tpu_custom_call.1} parent=11 // pred_fallthru
          _
        // Predicated region
        $region17: #{tpu_custom_call.1} parent=11 // pred_check
          %p175 = pneg %p129
        $region18: #{tpu_custom_call.1} parent=11 // pred_check_branch
          %177 = sbr.rel (%p175) target = $region20
        $region19: #{tpu_custom_call.1} parent=11 // pred_region
          _
        $region20: #{tpu_custom_call.1} parent=11 // pred_fallthru
          _
      $region12: #{tpu_custom_call.1} parent=5 // pred_fallthru
        _
      %p178 = scmp.lt.s32.totalorder %s19, 4
      // Predicated region
      $region21: #{tpu_custom_call.1} parent=5 // pred_check
        %p179 = pneg %p178
      $region22: #{tpu_custom_call.1} parent=5 // pred_check_branch
        %181 = sbr.rel (%p179) target = $region24
      $region23: #{tpu_custom_call.1} parent=5 // pred_region
        // Predicated region
        $region25: #{tpu_custom_call.1} parent=23 // pred_check
          %p182 = pneg %p53
        $region26: #{tpu_custom_call.1} parent=23 // pred_check_branch
          %184 = sbr.rel (%p182) target = $region28
        $region27: #{tpu_custom_call.1} parent=23 // pred_region
          %s185 = sand.u32 %s43, 1
          %s186 = scalar_lea.sflag [#allocation3], %s185
          %s187 = sand.u32 %s43, 1
          %s188 = smul.addr %s187, 8
          %s189 = scalar_lea.vmem [#allocation2], %s188
          %s191 = ssub.s32 128, 128
          %192 = vsyncadd %s186, %s191
          %s193 = smul.addr %s26, 2
          %s194 = sadd.s32 %s27, %s193
          %s195 = smul.addr %s194, 128
          %s196 = scalar_lea.hbm %s0, %s195
          %s198 = sshll.u32 %s189, 4
          %s199 = int_to_ptr.vmem [resolvable:$true] %s198
          %201 = dma.hbm_to_vmem [thread:$0]  %s196, 128, %s199, %s186
        $region28: #{tpu_custom_call.1} parent=23 // pred_fallthru
          _
        // Predicated region
        $region29: #{tpu_custom_call.1} parent=23 // pred_check
          %p202 = pneg %p81
        $region30: #{tpu_custom_call.1} parent=23 // pred_check_branch
          %204 = sbr.rel (%p202) target = $region32
        $region31: #{tpu_custom_call.1} parent=23 // pred_region
          %s205 = sand.u32 %s71, 1
          %s206 = scalar_lea.sflag [#allocation6], %s205
          %s207 = sand.u32 %s71, 1
          %s208 = smul.addr %s207, 8
          %s209 = scalar_lea.vmem [#allocation5], %s208
          %s211 = ssub.s32 128, 128
          %212 = vsyncadd %s206, %s211
          %s213 = smul.addr %s26, 2
          %s214 = sadd.s32 %s27, %s213
          %s215 = smul.addr %s214, 128
          %s216 = scalar_lea.hbm %s1, %s215
          %s218 = sshll.u32 %s209, 4
          %s219 = int_to_ptr.vmem [resolvable:$true] %s218
          %221 = dma.hbm_to_vmem [thread:$0]  %s216, 128, %s219, %s206
        $region32: #{tpu_custom_call.1} parent=23 // pred_fallthru
          _
      $region24: #{tpu_custom_call.1} parent=5 // pred_fallthru
        _
      %p222 = scmp.le.s32.totalorder 1, %s19
      %p223 = scmp.lt.s32.totalorder %s19, 5
      %p224 = pnand %p222, %p223
      %p225 = pneg %p224
      // Predicated region
      $region33: #{tpu_custom_call.1} parent=5 // pred_check
        _
      $region34: #{tpu_custom_call.1} parent=5 // pred_check_branch
        %227 = sbr.rel (%p224) target = $region36
      $region35: #{tpu_custom_call.1} parent=5 // pred_region
        %s228 = ssub.s32 %s19, 1
        %s229 = sand.u32 %s46, 1
        %s230 = scalar_lea.sflag [#allocation3], %s229
        %s231 = sand.u32 %s46, 1
        %s232 = smul.addr %s231, 8
        %s233 = scalar_lea.vmem [#allocation2], %s232
        // Predicated region
        $region37: #{tpu_custom_call.1} parent=35 // pred_check
          %p234 = pneg %p59
        $region38: #{tpu_custom_call.1} parent=35 // pred_check_branch
          %236 = sbr.rel (%p234) target = $region40
        $region39: #{tpu_custom_call.1} parent=35 // pred_region
          %237 = dma.done %s230, 128
        $region40: #{tpu_custom_call.1} parent=35 // pred_fallthru
          _
        %s238 = sand.u32 %s74, 1
        %s239 = scalar_lea.sflag [#allocation6], %s238
        %s240 = sand.u32 %s74, 1
        %s241 = smul.addr %s240, 8
        %s242 = scalar_lea.vmem [#allocation5], %s241
        // Predicated region
        $region41: #{tpu_custom_call.1} parent=35 // pred_check
          %p243 = pneg %p87
        $region42: #{tpu_custom_call.1} parent=35 // pred_check_branch
          %245 = sbr.rel (%p243) target = $region44
        $region43: #{tpu_custom_call.1} parent=35 // pred_region
          %246 = dma.done %s239, 128
        $region44: #{tpu_custom_call.1} parent=35 // pred_fallthru
          _
        %s247 = sand.u32 %s46, 1
        %s248 = scalar_lea.sflag [#allocation3], %s247
        %s249 = sand.u32 %s46, 1
        %s250 = smul.addr %s249, 8
        %s251 = scalar_lea.vmem [#allocation2], %s250
        %p252 = pneg %p59
        %p253 = pneg %p56
        %s254 = sand.u32 %s74, 1
        %s255 = scalar_lea.sflag [#allocation6], %s254
        %s256 = sand.u32 %s74, 1
        %s257 = smul.addr %s256, 8
        %s258 = scalar_lea.vmem [#allocation5], %s257
        %p259 = pneg %p87
        %p260 = pneg %p84
        %p261 = pneg %p108
        %p262 = pneg %p105
        %p263 = pneg %p129
        %p264 = pneg %p126
        %p265 = pneg %p157
        %p266 = pneg %p154
        %s267 = sand.u32 %s144, 1
        %s268 = scalar_lea.sflag [#allocation4], %s267
        %s269 = sand.u32 %s144, 1
        %s270 = smul.addr %s269, 8
        %s271 = scalar_lea.vmem [#allocation7], %s270
        %v273 = vld [vmem:[%s233] sm:$0xff]
        %v274 = vld [vmem:[%s242] sm:$0xff]
        %v275 = vld [vmem:[%s2] sm:$0xf]
        %v276 = vpack.c.bf16 %v274, %v273
        %v277 = vld [vmem:[%s3] sm:$0xff]
        %279 = vset.pattern.permute.xlu0 0
        %280 = vperm.xlu0 %279, %v277
        %v281 = vpop.permute.xlu0 %280
        %vm283 = vcmask 130048
        %v285 = vsel %vm283, %v275, 0
        %287 = vmatprep.subr.bf16.mxu0 0
        %288 = vmatpush1.bf16.msra.mxu0 0
        %289 = vmatprep.subr.bf16.mxu0 0
        %290 = vmatpush1.bf16.msra.mxu0 0
        %291 = vmatprep.subr.bf16.mxu0 0
        %292 = vmatpush1.bf16.msra.mxu0 0
        %293 = vmatprep.subr.bf16.mxu0 0
        %294 = vmatpush1.bf16.msra.mxu0 0
        %295 = vmatprep.subr.bf16.mxu0 0
        %296 = vmatpush1.bf16.msra.mxu0 0
        %297 = vmatprep.subr.bf16.mxu0 0
        %298 = vmatpush1.bf16.msra.mxu0 0
        %299 = vmatprep.subr.bf16.mxu0 0
        %300 = vmatpush1.bf16.msra.mxu0 0
        %301 = vmatprep.subr.bf16.mxu0 0
        %302 = vmatpush1.bf16.msra.mxu0 %v276
        %303 = vmatprep.subr.bf16.mxu0 0
        %304 = vmatpush2.bf16.msra.mxu0 0
        %305 = vmatprep.subr.bf16.mxu0 0
        %306 = vmatpush2.bf16.msra.mxu0 0
        %307 = vmatprep.subr.bf16.mxu0 0
        %308 = vmatpush2.bf16.msra.mxu0 0
        %309 = vmatprep.subr.bf16.mxu0 0
        %310 = vmatpush2.bf16.msra.mxu0 0
        %311 = vmatprep.subr.bf16.mxu0 0
        %312 = vmatpush2.bf16.msra.mxu0 0
        %313 = vmatprep.subr.bf16.mxu0 0
        %314 = vmatpush2.bf16.msra.mxu0 0
        %315 = vmatprep.subr.bf16.mxu0 0
        %316 = vmatpush2.bf16.msra.mxu0 0
        %317 = vmatprep.subr.bf16.mxu0 0
        %318 = vmatpush2.bf16.msra.mxu0 0
        %319 = vmatprep.mubr.bf16.mxu0 0
        %320 = vmatmul.mubr.bf16.gmra.mxu0 %v285
        %v321 = vpop.f32.mrf.mxu0
        %v322 = vadd.f32 %v281, %v321
        %v323 = vpop.f32.mrf.mxu0
        %v324 = vpop.f32.mrf.mxu0
        %v325 = vpop.f32.mrf.mxu0
        %326 = vdwg.mxu0
        %v327 = vadd.f32 %v322, %v273
        %v328 = vmax.f32 %v327, 0.0
        %329 = vst [vmem:[%s271] sm:$0xff] %v328
        %s330 = sand.u32 %s144, 1
        %s331 = scalar_lea.sflag [#allocation4], %s330
        %s332 = sand.u32 %s144, 1
        %s333 = smul.addr %s332, 8
        %s334 = scalar_lea.vmem [#allocation7], %s333
        // Predicated region
        $region45: #{tpu_custom_call.1} parent=35 // pred_check
          %p335 = pneg %p154
        $region46: #{tpu_custom_call.1} parent=35 // pred_check_branch
          %337 = sbr.rel (%p335) target = $region48
        $region47: #{tpu_custom_call.1} parent=35 // pred_region
          %s339 = ssub.s32 128, 128
          %340 = vsyncadd %s331, %s339
          %s341 = smul.addr %s28, 2
          %s342 = sadd.s32 %s29, %s341
          %s343 = smul.addr %s342, 128
          %s344 = scalar_lea.hbm %s4, %s343
          %s346 = sshll.u32 %s334, 4
          %s347 = int_to_ptr.vmem [resolvable:$true] %s346
          %349 = dma.vmem_to_hbm [thread:$0]  %s347, 128, %s344, %s331
        $region48: #{tpu_custom_call.1} parent=35 // pred_fallthru
          _
      $region36: #{tpu_custom_call.1} parent=5 // pred_fallthru
        _
      %p350 = scmp.le.s32.totalorder 2, %s19
      // Predicated region
      $region49: #{tpu_custom_call.1} parent=5 // pred_check
        %p351 = pneg %p350
      $region50: #{tpu_custom_call.1} parent=5 // pred_check_branch
        %353 = sbr.rel (%p351) target = $region52
      $region51: #{tpu_custom_call.1} parent=5 // pred_region
        %s354 = ssub.s32 %s19, 2
        // Predicated region
        $region53: #{tpu_custom_call.1} parent=51 // pred_check
          %p355 = pneg %p160
        $region54: #{tpu_custom_call.1} parent=51 // pred_check_branch
          %357 = sbr.rel (%p355) target = $region56
        $region55: #{tpu_custom_call.1} parent=51 // pred_region
          %s358 = sand.u32 %s145, 1
          %s359 = scalar_lea.sflag [#allocation4], %s358
          %s360 = sand.u32 %s145, 1
          %s361 = smul.addr %s360, 8
          %s362 = scalar_lea.vmem [#allocation7], %s361
          %363 = dma.done %s359, 128
        $region56: #{tpu_custom_call.1} parent=51 // pred_fallthru
          _
      $region52: #{tpu_custom_call.1} parent=5 // pred_fallthru
        _
    $region6: #{tpu_custom_call.1} parent=1 // loop_footer
      %s23 = sadd.s32 1, %s19
    $region7: #{tpu_custom_call.1} parent=1 // loop_footer_branch
      %18 = sbr.rel target = $region3
    $region8: #{tpu_custom_call.1} parent=1 // loop_exit
      _
    %364 = vsyncpa [#allocation3], 1
    %s365 = scalar_lea.sflag [#allocation3], 1
    %366 = vsyncpa %s365, 1
    %367 = vsyncpa [#allocation6], 1
    %s368 = scalar_lea.sflag [#allocation6], 1
    %369 = vsyncpa %s368, 1
    %370 = vsyncpa [#allocation4], 1
    %s371 = scalar_lea.sflag [#allocation4], 1
    %372 = vsyncpa %s371, 1

// kernel: tpu_custom_call.1
$region0: #{tpu_custom_call.1}
  #allocation0 [shape = 'u32[]', space=smem, size = 0x4, offset = 0x4, fixed_abs, tag = 'smem constant byte address 0x4 - core index']
  #allocation1 [shape = 'u32[144,128]{1,0:T(1,128)}', space=vmem, size = 0x12000, scoped, tag = 'internal scratch']
  %s0 = inlined_call_operand.hbm [shape: f32[2,8,256], index: 0, kind: input, shape index: {}]
  %s1 = inlined_call_operand.hbm [shape: f32[2,8,256], index: 1, kind: input, shape index: {}]
  %s2 = inlined_call_operand.vmem [shape: bf16[8,16], index: 2, kind: input, shape index: {}]
  %s3 = inlined_call_operand.vmem [shape: f32[8,1], index: 3, kind: input, shape index: {}]
  %s4 = inlined_call_operand.hbm [shape: f32[2,8,256], index: 4, kind: output, shape index: {}]
  %s5 = sld [smem:[#allocation0]]
  $region57: #{tpu_custom_call.1} parent=0
    _
  %s7 = ssub.s32 1, %s5
  %s8 = scalar_select 0, %s7, %s5
  $region1: #{tpu_custom_call.1} parent=0
    #allocation2 [shape = 'u8[8192]{0}', space=vmem, size = 0x2000, scoped, tag = 'input window, operand 0']
    #allocation3 [shape = 's32[2]{0}', space=sflag, size = 0x8, scoped, tag = 'scoped memory for tpu_custom_call.1']
    #allocation4 [shape = 's32[2]{0}', space=sflag, size = 0x8, scoped, tag = 'scoped memory for tpu_custom_call.1']
    #allocation5 [shape = 'u8[8192]{0}', space=vmem, size = 0x2000, scoped, tag = 'input window, operand 1']
    #allocation6 [shape = 's32[2]{0}', space=sflag, size = 0x8, scoped, tag = 'scoped memory for tpu_custom_call.1']
    #allocation7 [shape = 'u8[8192]{0}', space=vmem, size = 0x2000, scoped, tag = 'output window, operand 0']
    %9 = vsyncpa [#allocation3], 0
    %s10 = scalar_lea.sflag [#allocation3], 1
    %11 = vsyncpa %s10, 0
    %12 = vsyncpa [#allocation6], 0
    %s13 = scalar_lea.sflag [#allocation6], 1
    %14 = vsyncpa %s13, 0
    %15 = vsyncpa [#allocation4], 0
    %s16 = scalar_lea.sflag [#allocation4], 1
    %17 = vsyncpa %s16, 0
    loop: start=0, step=1, limit=6
    $region2: #{tpu_custom_call.1} parent=1 // loop_pre_header
      _
    $region3: #{tpu_custom_call.1} parent=1 // loop_header
      %s19 = sphi 0, %s23
      %p20 = scmp.ge.s32.totalorder %s19, 6
      %s26 = sphi 0, %s38
      %s27 = sphi 0, %s34
      %s28 = sphi 0, %s26
      %s29 = sphi 0, %s27
      %s30 = sphi 0, %s28
      %s31 = sphi 0, %s29
      %s43 = sphi 0, %s45
      %s46 = sphi 0, %s43
      %s47 = sphi 0, %s46
      %s63 = sphi 0, %s47
      %s71 = sphi 0, %s73
      %s74 = sphi 0, %s71
      %s75 = sphi 0, %s74
      %s91 = sphi 0, %s75
      %s95 = sphi 0, %s95
      %s97 = sphi 0, %s95
      %s98 = sphi 0, %s97
      %s112 = sphi 0, %s98
      %s116 = sphi 0, %s116
      %s118 = sphi 0, %s116
      %s119 = sphi 0, %s118
      %s133 = sphi 0, %s119
      %s141 = sphi 0, %s143
      %s144 = sphi 0, %s141
      %s145 = sphi 0, %s144
      %s161 = sphi 0, %s145
    $region4: #{tpu_custom_call.1} parent=1 // loop_header_branch
      %22 = sbr.rel (%p20) target = $region8
    $region5: #{tpu_custom_call.1} parent=1 // loop_body
      %s24 = ssub.s32 %s19, 1
      %s25 = ssub.s32 %s19, 2
      %s32 = sadd.s32 1, %s27
      %p33 = scmp.ge.s32.totalorder %s32, 2
      %s34 = scalar_select %p33, 0, %s32
      %s35 = sadd.s32 1, %s26
      %s36 = scalar_select %p33, %s35, %s26
      %p37 = scmp.ge.s32.totalorder %s36, 2
      %s38 = scalar_select %p37, 0, %s36
      %s39 = ssub.s32 %s26, %s38
      %s40 = ssub.s32 %s27, %s34
      %s41 = sor.u32 %s39, %s40
      %p42 = scmp.eq.s32.totalorder %s41, 0
      %s44 = sadd.s32 %s43, 1
      %s45 = scalar_select %p42, %s43, %s44
      %p48 = pneg %p42
      %p49 = scmp.eq.s32.totalorder %s19, 3
      %p50 = por %p48, %p49
      %p51 = scmp.ne.s32.totalorder %s43, %s46
      %p52 = scmp.eq.s32.totalorder %s19, 0
      %p53 = por %p51, %p52
      %p54 = scmp.ne.s32.totalorder %s43, %s46
      %p55 = scmp.eq.s32.totalorder %s24, 3
      %p56 = por %p54, %p55
      %p57 = scmp.ne.s32.totalorder %s46, %s47
      %p58 = scmp.eq.s32.totalorder %s24, 0
      %p59 = por %p57, %p58
      %p60 = scmp.ne.s32.totalorder %s46, %s47
      %p61 = scmp.eq.s32.totalorder %s25, 3
      %p62 = por %p60, %p61
      %p64 = scmp.ne.s32.totalorder %s47, %s63
      %p65 = scmp.eq.s32.totalorder %s25, 0
      %p66 = por %p64, %p65
      %s67 = ssub.s32 %s26, %s38
      %s68 = ssub.s32 %s27, %s34
      %s69 = sor.u32 %s67, %s68
      %p70 = scmp.eq.s32.totalorder %s69, 0
      %s72 = sadd.s32 %s71, 1
      %s73 = scalar_select %p70, %s71, %s72
      %p76 = pneg %p70
      %p77 = scmp.eq.s32.totalorder %s19, 3
      %p78 = por %p76, %p77
      %p79 = scmp.ne.s32.totalorder %s71, %s74
      %p80 = scmp.eq.s32.totalorder %s19, 0
      %p81 = por %p79, %p80
      %p82 = scmp.ne.s32.totalorder %s71, %s74
      %p83 = scmp.eq.s32.totalorder %s24, 3
      %p84 = por %p82, %p83
      %p85 = scmp.ne.s32.totalorder %s74, %s75
      %p86 = scmp.eq.s32.totalorder %s24, 0
      %p87 = por %p85, %p86
      %p88 = scmp.ne.s32.totalorder %s74, %s75
      %p89 = scmp.eq.s32.totalorder %s25, 3
      %p90 = por %p88, %p89
      %p92 = scmp.ne.s32.totalorder %s75, %s91
      %p93 = scmp.eq.s32.totalorder %s25, 0
      %p94 = por %p92, %p93
      %s96 = sadd.s32 %s95, 1
      %p99 = scmp.eq.s32.totalorder %s19, 3
      %p100 = scmp.ne.s32.totalorder %s95, %s97
      %p101 = scmp.eq.s32.totalorder %s19, 0
      %p102 = por %p100, %p101
      %p103 = scmp.ne.s32.totalorder %s95, %s97
      %p104 = scmp.eq.s32.totalorder %s24, 3
      %p105 = por %p103, %p104
      %p106 = scmp.ne.s32.totalorder %s97, %s98
      %p107 = scmp.eq.s32.totalorder %s24, 0
      %p108 = por %p106, %p107
      %p109 = scmp.ne.s32.totalorder %s97, %s98
      %p110 = scmp.eq.s32.totalorder %s25, 3
      %p111 = por %p109, %p110
      %p113 = scmp.ne.s32.totalorder %s98, %s112
      %p114 = scmp.eq.s32.totalorder %s25, 0
      %p115 = por %p113, %p114
      %s117 = sadd.s32 %s116, 1
      %p120 = scmp.eq.s32.totalorder %s19, 3
      %p121 = scmp.ne.s32.totalorder %s116, %s118
      %p122 = scmp.eq.s32.totalorder %s19, 0
      %p123 = por %p121, %p122
      %p124 = scmp.ne.s32.totalorder %s116, %s118
      %p125 = scmp.eq.s32.totalorder %s24, 3
      %p126 = por %p124, %p125
      %p127 = scmp.ne.s32.totalorder %s118, %s119
      %p128 = scmp.eq.s32.totalorder %s24, 0
      %p129 = por %p127, %p128
      %p130 = scmp.ne.s32.totalorder %s118, %s119
      %p131 = scmp.eq.s32.totalorder %s25, 3
      %p132 = por %p130, %p131
      %p134 = scmp.ne.s32.totalorder %s119, %s133
      %p135 = scmp.eq.s32.totalorder %s25, 0
      %p136 = por %p134, %p135
      %s137 = ssub.s32 %s26, %s38
      %s138 = ssub.s32 %s27, %s34
      %s139 = sor.u32 %s137, %s138
      %p140 = scmp.eq.s32.totalorder %s139, 0
      %s142 = sadd.s32 %s141, 1
      %s143 = scalar_select %p140, %s141, %s142
      %p146 = pneg %p140
      %p147 = scmp.eq.s32.totalorder %s19, 3
      %p148 = por %p146, %p147
      %p149 = scmp.ne.s32.totalorder %s141, %s144
      %p150 = scmp.eq.s32.totalorder %s19, 0
      %p151 = por %p149, %p150
      %p152 = scmp.ne.s32.totalorder %s141, %s144
      %p153 = scmp.eq.s32.totalorder %s24, 3
      %p154 = por %p152, %p153
      %p155 = scmp.ne.s32.totalorder %s144, %s145
      %p156 = scmp.eq.s32.totalorder %s24, 0
      %p157 = por %p155, %p156
      %p158 = scmp.ne.s32.totalorder %s144, %s145
      %p159 = scmp.eq.s32.totalorder %s25, 3
      %p160 = por %p158, %p159
      %p162 = scmp.ne.s32.totalorder %s145, %s161
      %p163 = scmp.eq.s32.totalorder %s25, 0
      %p164 = por %p162, %p163
      %p165 = scmp.le.s32.totalorder 1, %s19
      %p166 = scmp.lt.s32.totalorder %s19, 5
      %p167 = pnand %p165, %p166
      %p168 = pneg %p167
      // Predicated region
      $region9: #{tpu_custom_call.1} parent=5 // pred_check
        _
      $region10: #{tpu_custom_call.1} parent=5 // pred_check_branch
        %170 = sbr.rel (%p167) target = $region12
      $region11: #{tpu_custom_call.1} parent=5 // pred_region
        %s171 = ssub.s32 %s19, 1
        // Predicated region
        $region13: #{tpu_custom_call.1} parent=11 // pred_check
          %p172 = pneg %p108
        $region14: #{tpu_custom_call.1} parent=11 // pred_check_branch
          %174 = sbr.rel (%p172) target = $region16
        $region15: #{tpu_custom_call.1} parent=11 // pred_region
          _
        $region16: #{tpu_custom_call.1} parent=11 // pred_fallthru
          _
        // Predicated region
        $region17: #{tpu_custom_call.1} parent=11 // pred_check
          %p175 = pneg %p129
        $region18: #{tpu_custom_call.1} parent=11 // pred_check_branch
          %177 = sbr.rel (%p175) target = $region20
        $region19: #{tpu_custom_call.1} parent=11 // pred_region
          _
        $region20: #{tpu_custom_call.1} parent=11 // pred_fallthru
          _
      $region12: #{tpu_custom_call.1} parent=5 // pred_fallthru
        _
      %p178 = scmp.lt.s32.totalorder %s19, 4
      // Predicated region
      $region21: #{tpu_custom_call.1} parent=5 // pred_check
        %p179 = pneg %p178
      $region22: #{tpu_custom_call.1} parent=5 // pred_check_branch
        %181 = sbr.rel (%p179) target = $region24
      $region23: #{tpu_custom_call.1} parent=5 // pred_region
        // Predicated region
        $region25: #{tpu_custom_call.1} parent=23 // pred_check
          %p182 = pneg %p53
        $region26: #{tpu_custom_call.1} parent=23 // pred_check_branch
          %184 = sbr.rel (%p182) target = $region28
        $region27: #{tpu_custom_call.1} parent=23 // pred_region
          %s185 = sand.u32 %s43, 1
          %s186 = scalar_lea.sflag [#allocation3], %s185
          %s187 = sand.u32 %s43, 1
          %s188 = smul.addr %s187, 8
          %s189 = scalar_lea.vmem [#allocation2], %s188
          %s191 = ssub.s32 128, 128
          %192 = vsyncadd %s186, %s191
          %s193 = smul.addr %s26, 2
          %s194 = sadd.s32 %s27, %s193
          %s195 = smul.addr %s194, 128
          %s196 = scalar_lea.hbm %s0, %s195
          %s198 = sshll.u32 %s189, 4
          %s199 = int_to_ptr.vmem [resolvable:$true] %s198
          %201 = dma.hbm_to_vmem [thread:$0]  %s196, 128, %s199, %s186
        $region28: #{tpu_custom_call.1} parent=23 // pred_fallthru
          _
        // Predicated region
        $region29: #{tpu_custom_call.1} parent=23 // pred_check
          %p202 = pneg %p81
        $region30: #{tpu_custom_call.1} parent=23 // pred_check_branch
          %204 = sbr.rel (%p202) target = $region32
        $region31: #{tpu_custom_call.1} parent=23 // pred_region
          %s205 = sand.u32 %s71, 1
          %s206 = scalar_lea.sflag [#allocation6], %s205
          %s207 = sand.u32 %s71, 1
          %s208 = smul.addr %s207, 8
          %s209 = scalar_lea.vmem [#allocation5], %s208
          %s211 = ssub.s32 128, 128
          %212 = vsyncadd %s206, %s211
          %s213 = smul.addr %s26, 2
          %s214 = sadd.s32 %s27, %s213
          %s215 = smul.addr %s214, 128
          %s216 = scalar_lea.hbm %s1, %s215
          %s218 = sshll.u32 %s209, 4
          %s219 = int_to_ptr.vmem [resolvable:$true] %s218
          %221 = dma.hbm_to_vmem [thread:$0]  %s216, 128, %s219, %s206
        $region32: #{tpu_custom_call.1} parent=23 // pred_fallthru
          _
      $region24: #{tpu_custom_call.1} parent=5 // pred_fallthru
        _
      %p222 = scmp.le.s32.totalorder 1, %s19
      %p223 = scmp.lt.s32.totalorder %s19, 5
      %p224 = pnand %p222, %p223
      %p225 = pneg %p224
      // Predicated region
      $region33: #{tpu_custom_call.1} parent=5 // pred_check
        _
      $region34: #{tpu_custom_call.1} parent=5 // pred_check_branch
        %227 = sbr.rel (%p224) target = $region36
      $region35: #{tpu_custom_call.1} parent=5 // pred_region
        %s228 = ssub.s32 %s19, 1
        %s229 = sand.u32 %s46, 1
        %s230 = scalar_lea.sflag [#allocation3], %s229
        %s231 = sand.u32 %s46, 1
        %s232 = smul.addr %s231, 8
        %s233 = scalar_lea.vmem [#allocation2], %s232
        // Predicated region
        $region37: #{tpu_custom_call.1} parent=35 // pred_check
          %p234 = pneg %p59
        $region38: #{tpu_custom_call.1} parent=35 // pred_check_branch
          %236 = sbr.rel (%p234) target = $region40
        $region39: #{tpu_custom_call.1} parent=35 // pred_region
          %237 = dma.done %s230, 128
        $region40: #{tpu_custom_call.1} parent=35 // pred_fallthru
          _
        %s238 = sand.u32 %s74, 1
        %s239 = scalar_lea.sflag [#allocation6], %s238
        %s240 = sand.u32 %s74, 1
        %s241 = smul.addr %s240, 8
        %s242 = scalar_lea.vmem [#allocation5], %s241
        // Predicated region
        $region41: #{tpu_custom_call.1} parent=35 // pred_check
          %p243 = pneg %p87
        $region42: #{tpu_custom_call.1} parent=35 // pred_check_branch
          %245 = sbr.rel (%p243) target = $region44
        $region43: #{tpu_custom_call.1} parent=35 // pred_region
          %246 = dma.done %s239, 128
        $region44: #{tpu_custom_call.1} parent=35 // pred_fallthru
          _
        %s247 = sand.u32 %s46, 1
        %s248 = scalar_lea.sflag [#allocation3], %s247
        %s249 = sand.u32 %s46, 1
        %s250 = smul.addr %s249, 8
        %s251 = scalar_lea.vmem [#allocation2], %s250
        %p252 = pneg %p59
        %p253 = pneg %p56
        %s254 = sand.u32 %s74, 1
        %s255 = scalar_lea.sflag [#allocation6], %s254
        %s256 = sand.u32 %s74, 1
        %s257 = smul.addr %s256, 8
        %s258 = scalar_lea.vmem [#allocation5], %s257
        %p259 = pneg %p87
        %p260 = pneg %p84
        %p261 = pneg %p108
        %p262 = pneg %p105
        %p263 = pneg %p129
        %p264 = pneg %p126
        %p265 = pneg %p157
        %p266 = pneg %p154
        %s267 = sand.u32 %s144, 1
        %s268 = scalar_lea.sflag [#allocation4], %s267
        %s269 = sand.u32 %s144, 1
        %s270 = smul.addr %s269, 8
        %s271 = scalar_lea.vmem [#allocation7], %s270
        %v273 = vld [vmem:[%s233] sm:$0xff]
        %v274 = vld [vmem:[%s242] sm:$0xff]
        %v275 = vld [vmem:[%s2] sm:$0xf]
        %v276 = vpack.c.bf16 %v274, %v273
        %v277 = vld [vmem:[%s3] sm:$0xff]
        %279 = vset.pattern.permute.xlu0 0
        %280 = vperm.xlu0 %279, %v277
        %v281 = vpop.permute.xlu0 %280
        %vm283 = vcmask 130048
        %v285 = vsel %vm283, %v275, 0
        %287 = vmatprep.subr.bf16.mxu0 0
        %288 = vmatpush1.bf16.msra.mxu0 0
        %289 = vmatprep.subr.bf16.mxu0 0
        %290 = vmatpush1.bf16.msra.mxu0 0
        %291 = vmatprep.subr.bf16.mxu0 0
        %292 = vmatpush1.bf16.msra.mxu0 0
        %293 = vmatprep.subr.bf16.mxu0 0
        %294 = vmatpush1.bf16.msra.mxu0 0
        %295 = vmatprep.subr.bf16.mxu0 0
        %296 = vmatpush1.bf16.msra.mxu0 0
        %297 = vmatprep.subr.bf16.mxu0 0
        %298 = vmatpush1.bf16.msra.mxu0 0
        %299 = vmatprep.subr.bf16.mxu0 0
        %300 = vmatpush1.bf16.msra.mxu0 0
        %301 = vmatprep.subr.bf16.mxu0 0
        %302 = vmatpush1.bf16.msra.mxu0 %v276
        %303 = vmatprep.subr.bf16.mxu0 0
        %304 = vmatpush2.bf16.msra.mxu0 0
        %305 = vmatprep.subr.bf16.mxu0 0
        %306 = vmatpush2.bf16.msra.mxu0 0
        %307 = vmatprep.subr.bf16.mxu0 0
        %308 = vmatpush2.bf16.msra.mxu0 0
        %309 = vmatprep.subr.bf16.mxu0 0
        %310 = vmatpush2.bf16.msra.mxu0 0
        %311 = vmatprep.subr.bf16.mxu0 0
        %312 = vmatpush2.bf16.msra.mxu0 0
        %313 = vmatprep.subr.bf16.mxu0 0
        %314 = vmatpush2.bf16.msra.mxu0 0
        %315 = vmatprep.subr.bf16.mxu0 0
        %316 = vmatpush2.bf16.msra.mxu0 0
        %317 = vmatprep.subr.bf16.mxu0 0
        %318 = vmatpush2.bf16.msra.mxu0 0
        %319 = vmatprep.mubr.bf16.mxu0 0
        %320 = vmatmul.mubr.bf16.gmra.mxu0 %v285
        %v321 = vpop.f32.mrf.mxu0
        %v322 = vadd.f32 %v281, %v321
        %v323 = vpop.f32.mrf.mxu0
        %v324 = vpop.f32.mrf.mxu0
        %v325 = vpop.f32.mrf.mxu0
        %326 = vdwg.mxu0
        %v327 = vadd.f32 %v322, %v273
        %v328 = vmax.f32 %v327, 0.0
        %329 = vst [vmem:[%s271] sm:$0xff] %v328
        %s330 = sand.u32 %s144, 1
        %s331 = scalar_lea.sflag [#allocation4], %s330
        %s332 = sand.u32 %s144, 1
        %s333 = smul.addr %s332, 8
        %s334 = scalar_lea.vmem [#allocation7], %s333
        // Predicated region
        $region45: #{tpu_custom_call.1} parent=35 // pred_check
          %p335 = pneg %p154
        $region46: #{tpu_custom_call.1} parent=35 // pred_check_branch
          %337 = sbr.rel (%p335) target = $region48
        $region47: #{tpu_custom_call.1} parent=35 // pred_region
          %s339 = ssub.s32 128, 128
          %340 = vsyncadd %s331, %s339
          %s341 = smul.addr %s28, 2
          %s342 = sadd.s32 %s29, %s341
          %s343 = smul.addr %s342, 128
          %s344 = scalar_lea.hbm %s4, %s343
          %s346 = sshll.u32 %s334, 4
          %s347 = int_to_ptr.vmem [resolvable:$true] %s346
          %349 = dma.vmem_to_hbm [thread:$0]  %s347, 128, %s344, %s331
        $region48: #{tpu_custom_call.1} parent=35 // pred_fallthru
          _
      $region36: #{tpu_custom_call.1} parent=5 // pred_fallthru
        _
      %p350 = scmp.le.s32.totalorder 2, %s19
      // Predicated region
      $region49: #{tpu_custom_call.1} parent=5 // pred_check
        %p351 = pneg %p350
      $region50: #{tpu_custom_call.1} parent=5 // pred_check_branch
        %353 = sbr.rel (%p351) target = $region52
      $region51: #{tpu_custom_call.1} parent=5 // pred_region
        %s354 = ssub.s32 %s19, 2
        // Predicated region
        $region53: #{tpu_custom_call.1} parent=51 // pred_check
          %p355 = pneg %p160
        $region54: #{tpu_custom_call.1} parent=51 // pred_check_branch
          %357 = sbr.rel (%p355) target = $region56
        $region55: #{tpu_custom_call.1} parent=51 // pred_region
          %s358 = sand.u32 %s145, 1
          %s359 = scalar_lea.sflag [#allocation4], %s358
          %s360 = sand.u32 %s145, 1
          %s361 = smul.addr %s360, 8
          %s362 = scalar_lea.vmem [#allocation7], %s361
          %363 = dma.done %s359, 128
        $region56: #{tpu_custom_call.1} parent=51 // pred_fallthru
          _
      $region52: #{tpu_custom_call.1} parent=5 // pred_fallthru
        _
    $region6: #{tpu_custom_call.1} parent=1 // loop_footer
      %s23 = sadd.s32 1, %s19
    $region7: #{tpu_custom_call.1} parent=1 // loop_footer_branch
      %18 = sbr.rel target = $region3
    $region8: #{tpu_custom_call.1} parent=1 // loop_exit
      _
    %364 = vsyncpa [#allocation3], 1
    %s365 = scalar_lea.sflag [#allocation3], 1
    %366 = vsyncpa %s365, 1
    %367 = vsyncpa [#allocation6], 1
    %s368 = scalar_lea.sflag [#allocation6], 1
    %369 = vsyncpa %s368, 1
    %370 = vsyncpa [#allocation4], 1
    %s371 = scalar_lea.sflag [#allocation4], 1
    %372 = vsyncpa %s371, 1

</llo_original>
